<compile_context>
chip_gen: v7x
topology: tpu7x:2x2x1
jax: 0.10.0
libtpu: 0.0.40
codegen_flags: <defaults>
</compile_context>

<pallas_src>
import functools

import jax
import jax.numpy as jnp
from jax import lax
from jax.experimental import pallas as pl
from jax.experimental.pallas import tpu as pltpu

LN_EPS = 1e-12


def pos_enc_kernel(x_ref, pos_ref, tok_ref, gamma_ref, beta_ref, o_ref):
    # x_ref / o_ref : (seq_tile, B, D) in x's dtype
    # pos_ref       : (seq_tile, 1, D) position-embedding rows
    # tok_ref       : (1, 1, D)        selected token-type row (constant block)
    # gamma/beta    : (1, 1, D)        LayerNorm scale / shift (constant block)
    x = x_ref[...].astype(jnp.float32)
    # Implicit broadcast adds — nothing is materialized at (seq_tile*B, D).
    emb = x + pos_ref[...].astype(jnp.float32) + tok_ref[...].astype(jnp.float32)
    mean = jnp.mean(emb, axis=-1, keepdims=True)
    centered = emb - mean
    var = jnp.mean(centered * centered, axis=-1, keepdims=True)
    normed = centered * lax.rsqrt(var + LN_EPS)
    out = (normed * gamma_ref[...].astype(jnp.float32)
           + beta_ref[...].astype(jnp.float32))
    o_ref[...] = out.astype(o_ref.dtype)
    # TODO(synk): dropout (p=0.1) omitted — inference-mode identity; a training
    # variant would use pltpu.prng_seed + pltpu.stateful_bernoulli here.


def _num_steps(s, t):
    return -(-s // t)


def _choose_seq_tile(S, B, D, target_bytes=6 << 20):
    """Pick seq_tile so one (seq_tile, B, D) f32-basis stream is ~target_bytes,
    preferring >=4 grid steps (and an even count) so both v7x TensorCores get
    >=2 pipelined steps each.  seq_tile need not divide S (cdiv grid)."""
    b_pad = ((B + 7) // 8) * 8
    row_bytes = b_pad * D * 4                      # f32 basis per seq row
    t = max(1, min(S, target_bytes // row_bytes))
    min_steps = 4 if S >= 4 else (2 if S >= 2 else 1)
    if _num_steps(S, t) < min_steps:
        t = _num_steps(S, min_steps)               # == ceil(S / min_steps)
    steps = _num_steps(S, t)
    if steps % 2 and steps < S:                    # best-effort even core split
        t_alt = _num_steps(S, steps + 1)
        if _num_steps(S, t_alt) % 2 == 0:
            t = t_alt
    return t


def _vmem_limit_bytes(seq_tile, B, D):
    """2x double-buffered (x in + out) + pos + constants, with slack.
    Floor 32 MiB, cap 48 MiB (v7x physical VMEM is only 64 MiB)."""
    b_pad = ((B + 7) // 8) * 8
    x_tile = seq_tile * b_pad * D * 4              # f32-basis (conservative for bf16)
    pos_tile = seq_tile * 8 * D * 4                # (t, 1, D): sublane dim pads to 8
    consts = 3 * 8 * D * 4
    need = 2 * (2 * x_tile + pos_tile + consts) + (2 << 20)
    return int(min(max(need, 32 << 20), 48 << 20))


@functools.partial(jax.jit, static_argnames=("token_type",))
def positional_encodings(x, pos_table, tok_table, gamma, beta, token_type="sound"):
    """x: (S, B, D) seq-first. pos_table: (max_len, D). tok_table: (2, D)."""
    S, B, D = x.shape
    max_len = pos_table.shape[0]
    assert S <= max_len, "Input shape is longer than the maximum allowed"

    if token_type == "sound":
        tt_idx = 1
    elif token_type == "text":
        tt_idx = 0
    else:
        raise Exception("Invalid Token Type")

    # Free views / tiny static slices only — no extra pass over pos_table.
    pos3 = pos_table.reshape(max_len, 1, D)
    tok3 = tok_table[tt_idx].reshape(1, 1, D)
    gamma3 = gamma.reshape(1, 1, D)
    beta3 = beta.reshape(1, 1, D)

    seq_tile = _choose_seq_tile(S, B, D)
    grid = (pl.cdiv(S, seq_tile),)

    # NOTE: for B not a multiple of 8 the (seq_tile, B, D) block pads sublanes;
    # a flattened (S*B, D) layout would be denser in that case.
    out = pl.pallas_call(
        pos_enc_kernel,
        out_shape=jax.ShapeDtypeStruct((S, B, D), x.dtype),
        grid_spec=pltpu.PrefetchScalarGridSpec(
            num_scalar_prefetch=0,
            grid=grid,
            in_specs=[
                pl.BlockSpec((seq_tile, B, D), lambda i: (i, 0, 0)),
                pl.BlockSpec((seq_tile, 1, D), lambda i: (i, 0, 0)),
                pl.BlockSpec((1, 1, D), lambda i: (0, 0, 0)),
                pl.BlockSpec((1, 1, D), lambda i: (0, 0, 0)),
                pl.BlockSpec((1, 1, D), lambda i: (0, 0, 0)),
            ],
            out_specs=pl.BlockSpec((seq_tile, B, D), lambda i: (i, 0, 0)),
        ),
        compiler_params=pltpu.CompilerParams(
            dimension_semantics=("parallel",),
            vmem_limit_bytes=_vmem_limit_bytes(seq_tile, B, D),
        ),
    )(x, pos3, tok3, gamma3, beta3)
    return out


def reference(x, pos_table, tok_table, gamma, beta, token_type):
    S = x.shape[0]
    tt_idx = 1 if token_type == "sound" else 0
    x = x.astype(jnp.float32)
    emb = (x + pos_table[:S].astype(jnp.float32)[:, None, :]
           + tok_table[tt_idx].astype(jnp.float32)[None, None, :])
    mean = jnp.mean(emb, axis=-1, keepdims=True)
    var = jnp.mean((emb - mean) ** 2, axis=-1, keepdims=True)
    return ((emb - mean) / jnp.sqrt(var + LN_EPS)
            * gamma.astype(jnp.float32) + beta.astype(jnp.float32))


if __name__ == "__main__":
    key = jax.random.PRNGKey(0)
    k_x, k_pos, k_tok, k_g, k_b, k_x2 = jax.random.split(key, 6)

    MAX_LEN = 512

    # Case 1: float32, small shapes (seq=16, batch=8, d_model=128).
    S, B, D = 16, 8, 128
    x = jax.random.normal(k_x, (S, B, D), dtype=jnp.float32)
    pos_table = jax.random.normal(k_pos, (MAX_LEN, D), dtype=jnp.float32)
    tok_table = jax.random.normal(k_tok, (2, D), dtype=jnp.float32)
    gamma = 1.0 + 0.1 * jax.random.normal(k_g, (D,), dtype=jnp.float32)
    beta = 0.1 * jax.random.normal(k_b, (D,), dtype=jnp.float32)

    out = positional_encodings(x, pos_table, tok_table, gamma, beta,
                               token_type="sound")
    jax.block_until_ready(out)
    ref = reference(x, pos_table, tok_table, gamma, beta, "sound")
    assert out.shape == (S, B, D)
    assert jnp.max(jnp.abs(out - ref)) < 1e-5

    # Case 2: bf16 I/O (f32 math in-kernel), ragged multi-step grid, "text".
    S2, B2, D2 = 50, 8, 256   # S=50 does not divide the chosen tile -> ragged last block
    x2 = jax.random.normal(k_x2, (S2, B2, D2), dtype=jnp.float32).astype(jnp.bfloat16)
    pos_table2 = jax.random.normal(k_pos, (MAX_LEN, D2), dtype=jnp.float32)
    tok_table2 = jax.random.normal(k_tok, (2, D2), dtype=jnp.float32)
    gamma_b = jnp.ones((D2,), jnp.float32)
    beta_b = jnp.zeros((D2,), jnp.float32)

    out2 = positional_encodings(x2, pos_table2, tok_table2, gamma_b, beta_b,
                                token_type="text")
    jax.block_until_ready(out2)
    assert out2.dtype == jnp.bfloat16
    assert out2.shape == (S2, B2, D2)
    ref2 = reference(x2.astype(jnp.float32), pos_table2, tok_table2,
                     gamma_b, beta_b, "text")
    assert jnp.max(jnp.abs(out2.astype(jnp.float32) - ref2)) < 5e-2

    print("KERNEL_OK")
</pallas_src>

<mosaic_0001>
module attributes {stable_mosaic.version = 11 : i64} {
  func.func @pos_enc_kernel(%arg0: i32, %arg1: memref<4x8x128xf32, #tpu.memory_space<vmem>>, %arg2: memref<4x1x128xf32, #tpu.memory_space<vmem>>, %arg3: memref<1x1x128xf32, #tpu.memory_space<vmem>>, %arg4: memref<1x1x128xf32, #tpu.memory_space<vmem>>, %arg5: memref<1x1x128xf32, #tpu.memory_space<vmem>>, %arg6: memref<4x8x128xf32, #tpu.memory_space<vmem>>) attributes {dimension_semantics = [#tpu.dimension_semantics<parallel>], iteration_bounds = array<i64: 4>, scalar_prefetch = 0 : i64, scratch_operands = 0 : i64, tpu.core_type = #tpu.core_type<tc>, window_params = [{transform_indices = @transform_0, window_bounds = array<i64: 4, 8, 128>}, {transform_indices = @transform_1, window_bounds = array<i64: 4, 1, 128>}, {pipeline_mode = #tpu.pipeline_mode<synchronous>, transform_indices = @transform_2, window_bounds = array<i64: 1, 1, 128>}, {pipeline_mode = #tpu.pipeline_mode<synchronous>, transform_indices = @transform_3, window_bounds = array<i64: 1, 1, 128>}, {pipeline_mode = #tpu.pipeline_mode<synchronous>, transform_indices = @transform_4, window_bounds = array<i64: 1, 1, 128>}, {transform_indices = @transform_5, window_bounds = array<i64: 4, 8, 128>}]} {
    %c0 = arith.constant 0 : index
    %c0_0 = arith.constant 0 : index
    %c0_1 = arith.constant 0 : index
    %0 = vector.load %arg1[%c0, %c0_0, %c0_1] : memref<4x8x128xf32, #tpu.memory_space<vmem>>, vector<4x8x128xf32>
    %c0_2 = arith.constant 0 : index
    %c0_3 = arith.constant 0 : index
    %c0_4 = arith.constant 0 : index
    %1 = vector.load %arg2[%c0_2, %c0_3, %c0_4] : memref<4x1x128xf32, #tpu.memory_space<vmem>>, vector<4x1x128xf32>
    %2 = vector.broadcast %1 : vector<4x1x128xf32> to vector<4x8x128xf32>
    %3 = arith.addf %0, %2 : vector<4x8x128xf32>
    %c0_5 = arith.constant 0 : index
    %c0_6 = arith.constant 0 : index
    %c0_7 = arith.constant 0 : index
    %4 = vector.load %arg3[%c0_5, %c0_6, %c0_7] : memref<1x1x128xf32, #tpu.memory_space<vmem>>, vector<1x1x128xf32>
    %5 = vector.broadcast %4 : vector<1x1x128xf32> to vector<4x8x128xf32>
    %6 = arith.addf %3, %5 : vector<4x8x128xf32>
    %cst = arith.constant dense<0.000000e+00> : vector<4x8xf32>
    %7 = vector.multi_reduction <add>, %6, %cst [2] : vector<4x8x128xf32> to vector<4x8xf32>
    %8 = vector.shape_cast %7 : vector<4x8xf32> to vector<4x8x1xf32>
    %cst_8 = arith.constant 1.280000e+02 : f32
    %9 = vector.broadcast %cst_8 : f32 to vector<4x8x1xf32>
    %10 = arith.divf %8, %9 : vector<4x8x1xf32>
    %11 = vector.broadcast %10 : vector<4x8x1xf32> to vector<4x8x128xf32>
    %12 = arith.subf %6, %11 : vector<4x8x128xf32>
    %13 = arith.mulf %12, %12 : vector<4x8x128xf32>
    %cst_9 = arith.constant dense<0.000000e+00> : vector<4x8xf32>
    %14 = vector.multi_reduction <add>, %13, %cst_9 [2] : vector<4x8x128xf32> to vector<4x8xf32>
    %15 = vector.shape_cast %14 : vector<4x8xf32> to vector<4x8x1xf32>
    %cst_10 = arith.constant 1.280000e+02 : f32
    %16 = vector.broadcast %cst_10 : f32 to vector<4x8x1xf32>
    %17 = arith.divf %15, %16 : vector<4x8x1xf32>
    %cst_11 = arith.constant 9.99999996E-13 : f32
    %18 = vector.broadcast %cst_11 : f32 to vector<4x8x1xf32>
    %19 = arith.addf %17, %18 : vector<4x8x1xf32>
    %20 = math.rsqrt %19 : vector<4x8x1xf32>
    %21 = vector.broadcast %20 : vector<4x8x1xf32> to vector<4x8x128xf32>
    %22 = arith.mulf %12, %21 : vector<4x8x128xf32>
    %c0_12 = arith.constant 0 : index
    %c0_13 = arith.constant 0 : index
    %c0_14 = arith.constant 0 : index
    %23 = vector.load %arg4[%c0_12, %c0_13, %c0_14] : memref<1x1x128xf32, #tpu.memory_space<vmem>>, vector<1x1x128xf32>
    %24 = vector.broadcast %23 : vector<1x1x128xf32> to vector<4x8x128xf32>
    %25 = arith.mulf %22, %24 : vector<4x8x128xf32>
    %c0_15 = arith.constant 0 : index
    %c0_16 = arith.constant 0 : index
    %c0_17 = arith.constant 0 : index
    %26 = vector.load %arg5[%c0_15, %c0_16, %c0_17] : memref<1x1x128xf32, #tpu.memory_space<vmem>>, vector<1x1x128xf32>
    %27 = vector.broadcast %26 : vector<1x1x128xf32> to vector<4x8x128xf32>
    %28 = arith.addf %25, %27 : vector<4x8x128xf32>
    %c0_18 = arith.constant 0 : index
    %c0_19 = arith.constant 0 : index
    %c0_20 = arith.constant 0 : index
    %29 = vector.load %arg6[%c0_18, %c0_19, %c0_20] : memref<4x8x128xf32, #tpu.memory_space<vmem>>, vector<4x8x128xf32>
    tpu.vector_store %arg6[%c0_18, %c0_19, %c0_20], %28 {strides = array<i32>} : memref<4x8x128xf32, #tpu.memory_space<vmem>>, vector<4x8x128xf32>,
    return
  }
  func.func @transform_0(%arg0: i32) -> (i32, i32, i32) {
    %c0_i32 = arith.constant 0 : i32
    %c0_i32_0 = arith.constant 0 : i32
    %c0_i32_1 = arith.constant 0 : i32
    return %arg0, %c0_i32, %c0_i32_0 : i32, i32, i32
  }
  func.func @transform_1(%arg0: i32) -> (i32, i32, i32) {
    %c0_i32 = arith.constant 0 : i32
    %c0_i32_0 = arith.constant 0 : i32
    %c0_i32_1 = arith.constant 0 : i32
    return %arg0, %c0_i32, %c0_i32_0 : i32, i32, i32
  }
  func.func @transform_2(%arg0: i32) -> (i32, i32, i32) {
    %c0_i32 = arith.constant 0 : i32
    %c0_i32_0 = arith.constant 0 : i32
    %c0_i32_1 = arith.constant 0 : i32
    %c0_i32_2 = arith.constant 0 : i32
    return %c0_i32, %c0_i32_0, %c0_i32_1 : i32, i32, i32
  }
  func.func @transform_3(%arg0: i32) -> (i32, i32, i32) {
    %c0_i32 = arith.constant 0 : i32
    %c0_i32_0 = arith.constant 0 : i32
    %c0_i32_1 = arith.constant 0 : i32
    %c0_i32_2 = arith.constant 0 : i32
    return %c0_i32, %c0_i32_0, %c0_i32_1 : i32, i32, i32
  }
  func.func @transform_4(%arg0: i32) -> (i32, i32, i32) {
    %c0_i32 = arith.constant 0 : i32
    %c0_i32_0 = arith.constant 0 : i32
    %c0_i32_1 = arith.constant 0 : i32
    %c0_i32_2 = arith.constant 0 : i32
    return %c0_i32, %c0_i32_0, %c0_i32_1 : i32, i32, i32
  }
  func.func @transform_5(%arg0: i32) -> (i32, i32, i32) {
    %c0_i32 = arith.constant 0 : i32
    %c0_i32_0 = arith.constant 0 : i32
    %c0_i32_1 = arith.constant 0 : i32
    return %arg0, %c0_i32, %c0_i32_0 : i32, i32, i32
  }
}

</mosaic_0001>

<llo_original>
// kernel: positional_encodings.1
$region0: #{positional_encodings.1}
  #allocation0 [shape = 'u32[]', space=smem, size = 0x4, offset = 0x4, fixed_abs, tag = 'smem constant byte address 0x4 - core index']
  #allocation1 [shape = 'u32[144,128]{1,0:T(1,128)}', space=vmem, size = 0x12000, scoped, tag = 'internal scratch']
  %s0 = inlined_call_operand.hbm [shape: f32[16,8,128], index: 0, kind: input, shape index: {}]
  %s1 = inlined_call_operand.hbm [shape: f32[512,1,128], index: 1, kind: input, shape index: {}]
  %s2 = inlined_call_operand.vmem [shape: f32[1,1,128], index: 2, kind: input, shape index: {}]
  %s3 = inlined_call_operand.vmem [shape: f32[1,1,128], index: 3, kind: input, shape index: {}]
  %s4 = inlined_call_operand.vmem [shape: f32[1,1,128], index: 4, kind: input, shape index: {}]
  %s5 = inlined_call_operand.hbm [shape: f32[16,8,128], index: 5, kind: output, shape index: {}]
  %s6 = sld [smem:[#allocation0]]
  $region61: #{positional_encodings.1} parent=0
    _
  %s8 = ssub.s32 1, %s6
  %s9 = scalar_select 0, %s8, %s6
  $region1: #{positional_encodings.1} parent=0
    #allocation2 [shape = 'u8[32768]{0}', space=vmem, size = 0x8000, scoped, tag = 'input window, operand 0']
    #allocation3 [shape = 's32[2]{0}', space=sflag, size = 0x8, scoped, tag = 'scoped memory for positional_encodings.1']
    #allocation4 [shape = 's32[2]{0}', space=sflag, size = 0x8, scoped, tag = 'scoped memory for positional_encodings.1']
    #allocation5 [shape = 'u8[4096]{0}', space=vmem, size = 0x1000, scoped, tag = 'input window, operand 1']
    #allocation6 [shape = 's32[2]{0}', space=sflag, size = 0x8, scoped, tag = 'scoped memory for positional_encodings.1']
    #allocation7 [shape = 'u8[32768]{0}', space=vmem, size = 0x8000, scoped, tag = 'output window, operand 0']
    %10 = vsyncpa [#allocation3], 0
    %s11 = scalar_lea.sflag [#allocation3], 1
    %12 = vsyncpa %s11, 0
    %13 = vsyncpa [#allocation6], 0
    %s14 = scalar_lea.sflag [#allocation6], 1
    %15 = vsyncpa %s14, 0
    %16 = vsyncpa [#allocation4], 0
    %s17 = scalar_lea.sflag [#allocation4], 1
    %18 = vsyncpa %s17, 0
    loop: start=0, step=1, limit=6
    $region2: #{positional_encodings.1} parent=1 // loop_pre_header
      _
    $region3: #{positional_encodings.1} parent=1 // loop_header
      %s20 = sphi 0, %s24
      %p21 = scmp.ge.s32.totalorder %s20, 6
      %s30 = sphi 0, %s32
      %s33 = sphi 0, %s30
      %s34 = sphi 0, %s33
      %s50 = sphi 0, %s34
      %s56 = sphi 0, %s58
      %s59 = sphi 0, %s56
      %s60 = sphi 0, %s59
      %s76 = sphi 0, %s60
      %s80 = sphi 0, %s80
      %s82 = sphi 0, %s80
      %s83 = sphi 0, %s82
      %s97 = sphi 0, %s83
      %s101 = sphi 0, %s101
      %s103 = sphi 0, %s101
      %s104 = sphi 0, %s103
      %s118 = sphi 0, %s104
      %s122 = sphi 0, %s122
      %s124 = sphi 0, %s122
      %s125 = sphi 0, %s124
      %s139 = sphi 0, %s125
      %s145 = sphi 0, %s147
      %s148 = sphi 0, %s145
      %s149 = sphi 0, %s148
      %s165 = sphi 0, %s149
    $region4: #{positional_encodings.1} parent=1 // loop_header_branch
      %23 = sbr.rel (%p21) target = $region8
    $region5: #{positional_encodings.1} parent=1 // loop_body
      %s25 = ssub.s32 %s20, 1
      %s26 = ssub.s32 %s20, 2
      %s27 = sadd.s32 %s20, 1
      %s28 = ssub.s32 %s20, %s27
      %p29 = scmp.eq.s32.totalorder %s28, 0
      %s31 = sadd.s32 %s30, 1
      %s32 = scalar_select %p29, %s30, %s31
      %p35 = pneg %p29
      %p36 = scmp.eq.s32.totalorder %s20, 3
      %p37 = por %p35, %p36
      %p38 = scmp.ne.s32.totalorder %s30, %s33
      %p39 = scmp.eq.s32.totalorder %s20, 0
      %p40 = por %p38, %p39
      %p41 = scmp.ne.s32.totalorder %s30, %s33
      %p42 = scmp.eq.s32.totalorder %s25, 3
      %p43 = por %p41, %p42
      %p44 = scmp.ne.s32.totalorder %s33, %s34
      %p45 = scmp.eq.s32.totalorder %s25, 0
      %p46 = por %p44, %p45
      %p47 = scmp.ne.s32.totalorder %s33, %s34
      %p48 = scmp.eq.s32.totalorder %s26, 3
      %p49 = por %p47, %p48
      %p51 = scmp.ne.s32.totalorder %s34, %s50
      %p52 = scmp.eq.s32.totalorder %s26, 0
      %p53 = por %p51, %p52
      %s54 = ssub.s32 %s20, %s27
      %p55 = scmp.eq.s32.totalorder %s54, 0
      %s57 = sadd.s32 %s56, 1
      %s58 = scalar_select %p55, %s56, %s57
      %p61 = pneg %p55
      %p62 = scmp.eq.s32.totalorder %s20, 3
      %p63 = por %p61, %p62
      %p64 = scmp.ne.s32.totalorder %s56, %s59
      %p65 = scmp.eq.s32.totalorder %s20, 0
      %p66 = por %p64, %p65
      %p67 = scmp.ne.s32.totalorder %s56, %s59
      %p68 = scmp.eq.s32.totalorder %s25, 3
      %p69 = por %p67, %p68
      %p70 = scmp.ne.s32.totalorder %s59, %s60
      %p71 = scmp.eq.s32.totalorder %s25, 0
      %p72 = por %p70, %p71
      %p73 = scmp.ne.s32.totalorder %s59, %s60
      %p74 = scmp.eq.s32.totalorder %s26, 3
      %p75 = por %p73, %p74
      %p77 = scmp.ne.s32.totalorder %s60, %s76
      %p78 = scmp.eq.s32.totalorder %s26, 0
      %p79 = por %p77, %p78
      %s81 = sadd.s32 %s80, 1
      %p84 = scmp.eq.s32.totalorder %s20, 3
      %p85 = scmp.ne.s32.totalorder %s80, %s82
      %p86 = scmp.eq.s32.totalorder %s20, 0
      %p87 = por %p85, %p86
      %p88 = scmp.ne.s32.totalorder %s80, %s82
      %p89 = scmp.eq.s32.totalorder %s25, 3
      %p90 = por %p88, %p89
      %p91 = scmp.ne.s32.totalorder %s82, %s83
      %p92 = scmp.eq.s32.totalorder %s25, 0
      %p93 = por %p91, %p92
      %p94 = scmp.ne.s32.totalorder %s82, %s83
      %p95 = scmp.eq.s32.totalorder %s26, 3
      %p96 = por %p94, %p95
      %p98 = scmp.ne.s32.totalorder %s83, %s97
      %p99 = scmp.eq.s32.totalorder %s26, 0
      %p100 = por %p98, %p99
      %s102 = sadd.s32 %s101, 1
      %p105 = scmp.eq.s32.totalorder %s20, 3
      %p106 = scmp.ne.s32.totalorder %s101, %s103
      %p107 = scmp.eq.s32.totalorder %s20, 0
      %p108 = por %p106, %p107
      %p109 = scmp.ne.s32.totalorder %s101, %s103
      %p110 = scmp.eq.s32.totalorder %s25, 3
      %p111 = por %p109, %p110
      %p112 = scmp.ne.s32.totalorder %s103, %s104
      %p113 = scmp.eq.s32.totalorder %s25, 0
      %p114 = por %p112, %p113
      %p115 = scmp.ne.s32.totalorder %s103, %s104
      %p116 = scmp.eq.s32.totalorder %s26, 3
      %p117 = por %p115, %p116
      %p119 = scmp.ne.s32.totalorder %s104, %s118
      %p120 = scmp.eq.s32.totalorder %s26, 0
      %p121 = por %p119, %p120
      %s123 = sadd.s32 %s122, 1
      %p126 = scmp.eq.s32.totalorder %s20, 3
      %p127 = scmp.ne.s32.totalorder %s122, %s124
      %p128 = scmp.eq.s32.totalorder %s20, 0
      %p129 = por %p127, %p128
      %p130 = scmp.ne.s32.totalorder %s122, %s124
      %p131 = scmp.eq.s32.totalorder %s25, 3
      %p132 = por %p130, %p131
      %p133 = scmp.ne.s32.totalorder %s124, %s125
      %p134 = scmp.eq.s32.totalorder %s25, 0
      %p135 = por %p133, %p134
      %p136 = scmp.ne.s32.totalorder %s124, %s125
      %p137 = scmp.eq.s32.totalorder %s26, 3
      %p138 = por %p136, %p137
      %p140 = scmp.ne.s32.totalorder %s125, %s139
      %p141 = scmp.eq.s32.totalorder %s26, 0
      %p142 = por %p140, %p141
      %s143 = ssub.s32 %s20, %s27
      %p144 = scmp.eq.s32.totalorder %s143, 0
      %s146 = sadd.s32 %s145, 1
      %s147 = scalar_select %p144, %s145, %s146
      %p150 = pneg %p144
      %p151 = scmp.eq.s32.totalorder %s20, 3
      %p152 = por %p150, %p151
      %p153 = scmp.ne.s32.totalorder %s145, %s148
      %p154 = scmp.eq.s32.totalorder %s20, 0
      %p155 = por %p153, %p154
      %p156 = scmp.ne.s32.totalorder %s145, %s148
      %p157 = scmp.eq.s32.totalorder %s25, 3
      %p158 = por %p156, %p157
      %p159 = scmp.ne.s32.totalorder %s148, %s149
      %p160 = scmp.eq.s32.totalorder %s25, 0
      %p161 = por %p159, %p160
      %p162 = scmp.ne.s32.totalorder %s148, %s149
      %p163 = scmp.eq.s32.totalorder %s26, 3
      %p164 = por %p162, %p163
      %p166 = scmp.ne.s32.totalorder %s149, %s165
      %p167 = scmp.eq.s32.totalorder %s26, 0
      %p168 = por %p166, %p167
      %p169 = scmp.le.s32.totalorder 1, %s20
      %p170 = scmp.lt.s32.totalorder %s20, 5
      %p171 = pnand %p169, %p170
      %p172 = pneg %p171
      // Predicated region
      $region9: #{positional_encodings.1} parent=5 // pred_check
        _
      $region10: #{positional_encodings.1} parent=5 // pred_check_branch
        %174 = sbr.rel (%p171) target = $region12
      $region11: #{positional_encodings.1} parent=5 // pred_region
        %s175 = ssub.s32 %s20, 1
        // Predicated region
        $region13: #{positional_encodings.1} parent=11 // pred_check
          %p176 = pneg %p93
        $region14: #{positional_encodings.1} parent=11 // pred_check_branch
          %178 = sbr.rel (%p176) target = $region16
        $region15: #{positional_encodings.1} parent=11 // pred_region
          _
        $region16: #{positional_encodings.1} parent=11 // pred_fallthru
          _
        // Predicated region
        $region17: #{positional_encodings.1} parent=11 // pred_check
          %p179 = pneg %p114
        $region18: #{positional_encodings.1} parent=11 // pred_check_branch
          %181 = sbr.rel (%p179) target = $region20
        $region19: #{positional_encodings.1} parent=11 // pred_region
          _
        $region20: #{positional_encodings.1} parent=11 // pred_fallthru
          _
        // Predicated region
        $region21: #{positional_encodings.1} parent=11 // pred_check
          %p182 = pneg %p135
        $region22: #{positional_encodings.1} parent=11 // pred_check_branch
          %184 = sbr.rel (%p182) target = $region24
        $region23: #{positional_encodings.1} parent=11 // pred_region
          _
        $region24: #{positional_encodings.1} parent=11 // pred_fallthru
          _
      $region12: #{positional_encodings.1} parent=5 // pred_fallthru
        _
      %p185 = scmp.lt.s32.totalorder %s20, 4
      // Predicated region
      $region25: #{positional_encodings.1} parent=5 // pred_check
        %p186 = pneg %p185
      $region26: #{positional_encodings.1} parent=5 // pred_check_branch
        %188 = sbr.rel (%p186) target = $region28
      $region27: #{positional_encodings.1} parent=5 // pred_region
        // Predicated region
        $region29: #{positional_encodings.1} parent=27 // pred_check
          %p189 = pneg %p40
        $region30: #{positional_encodings.1} parent=27 // pred_check_branch
          %191 = sbr.rel (%p189) target = $region32
        $region31: #{positional_encodings.1} parent=27 // pred_region
          %s192 = sand.u32 %s30, 1
          %s193 = scalar_lea.sflag [#allocation3], %s192
          %s194 = sand.u32 %s30, 1
          %s195 = smul.addr %s194, 32
          %s196 = scalar_lea.vmem [#allocation2], %s195
          %s197 = smul.u32 4, %s20
          %s199 = ssub.s32 512, 512
          %200 = vsyncadd %s193, %s199
          %s201 = smul.addr %s197, 128
          %s202 = scalar_lea.hbm %s0, %s201
          %s203 = sshll.u32 %s196, 4
          %s204 = int_to_ptr.vmem [resolvable:$true] %s203
          %209 = dma.hbm_to_vmem [thread:$0]  %s202, 512, %s204, %s193, 128, 128, 8
        $region32: #{positional_encodings.1} parent=27 // pred_fallthru
          _
        // Predicated region
        $region33: #{positional_encodings.1} parent=27 // pred_check
          %p210 = pneg %p66
        $region34: #{positional_encodings.1} parent=27 // pred_check_branch
          %212 = sbr.rel (%p210) target = $region36
        $region35: #{positional_encodings.1} parent=27 // pred_region
          %s213 = sand.u32 %s56, 1
          %s214 = scalar_lea.sflag [#allocation6], %s213
          %s215 = sand.u32 %s56, 1
          %s216 = smul.addr %s215, 4
          %s217 = scalar_lea.vmem [#allocation5], %s216
          %s218 = smul.u32 4, %s20
          %s220 = ssub.s32 64, 64
          %221 = vsyncadd %s214, %s220
          %s222 = smul.addr %s218, 16
          %s223 = scalar_lea.hbm %s1, %s222
          %s224 = sshll.u32 %s217, 4
          %s225 = int_to_ptr.vmem [resolvable:$true] %s224
          %230 = dma.hbm_to_vmem [thread:$0]  %s223, 64, %s225, %s214, 16, 16, 1
        $region36: #{positional_encodings.1} parent=27 // pred_fallthru
          _
      $region28: #{positional_encodings.1} parent=5 // pred_fallthru
        _
      %p231 = scmp.le.s32.totalorder 1, %s20
      %p232 = scmp.lt.s32.totalorder %s20, 5
      %p233 = pnand %p231, %p232
      %p234 = pneg %p233
      // Predicated region
      $region37: #{positional_encodings.1} parent=5 // pred_check
        _
      $region38: #{positional_encodings.1} parent=5 // pred_check_branch
        %236 = sbr.rel (%p233) target = $region40
      $region39: #{positional_encodings.1} parent=5 // pred_region
        %s237 = ssub.s32 %s20, 1
        %s238 = sand.u32 %s33, 1
        %s239 = scalar_lea.sflag [#allocation3], %s238
        %s240 = sand.u32 %s33, 1
        %s241 = smul.addr %s240, 32
        %s242 = scalar_lea.vmem [#allocation2], %s241
        // Predicated region
        $region41: #{positional_encodings.1} parent=39 // pred_check
          %p243 = pneg %p46
        $region42: #{positional_encodings.1} parent=39 // pred_check_branch
          %245 = sbr.rel (%p243) target = $region44
        $region43: #{positional_encodings.1} parent=39 // pred_region
          %246 = dma.done %s239, 512
        $region44: #{positional_encodings.1} parent=39 // pred_fallthru
          _
        %s247 = sand.u32 %s59, 1
        %s248 = scalar_lea.sflag [#allocation6], %s247
        %s249 = sand.u32 %s59, 1
        %s250 = smul.addr %s249, 4
        %s251 = scalar_lea.vmem [#allocation5], %s250
        // Predicated region
        $region45: #{positional_encodings.1} parent=39 // pred_check
          %p252 = pneg %p72
        $region46: #{positional_encodings.1} parent=39 // pred_check_branch
          %254 = sbr.rel (%p252) target = $region48
        $region47: #{positional_encodings.1} parent=39 // pred_region
          %255 = dma.done %s248, 64
        $region48: #{positional_encodings.1} parent=39 // pred_fallthru
          _
        %s256 = sand.u32 %s33, 1
        %s257 = scalar_lea.sflag [#allocation3], %s256
        %s258 = sand.u32 %s33, 1
        %s259 = smul.addr %s258, 32
        %s260 = scalar_lea.vmem [#allocation2], %s259
        %p261 = pneg %p46
        %p262 = pneg %p43
        %s263 = sand.u32 %s59, 1
        %s264 = scalar_lea.sflag [#allocation6], %s263
        %s265 = sand.u32 %s59, 1
        %s266 = smul.addr %s265, 4
        %s267 = scalar_lea.vmem [#allocation5], %s266
        %p268 = pneg %p72
        %p269 = pneg %p69
        %p270 = pneg %p93
        %p271 = pneg %p90
        %p272 = pneg %p114
        %p273 = pneg %p111
        %p274 = pneg %p135
        %p275 = pneg %p132
        %p276 = pneg %p161
        %p277 = pneg %p158
        %s278 = sand.u32 %s148, 1
        %s279 = scalar_lea.sflag [#allocation4], %s278
        %s280 = sand.u32 %s148, 1
        %s281 = smul.addr %s280, 32
        %s282 = scalar_lea.vmem [#allocation7], %s281
        %s283 = smul.u32 4, %s25
        %s284 = smul.u32 4, %s25
        %s285 = smul.u32 4, %s25
        %v286 = vld [vmem:[%s242] sm:$0xff]
        %v287 = vld [vmem:[%s242 + $0x8] sm:$0xff]
        %v288 = vld [vmem:[%s242 + $0x10] sm:$0xff]
        %v289 = vld [vmem:[%s242 + $0x18] sm:$0xff]
        %v290 = vld [vmem:[%s251] sm:$0x1]
        %v291 = vld [vmem:[%s251 + $0x1] sm:$0x1]
        %v292 = vld [vmem:[%s251 + $0x2] sm:$0x1]
        %v293 = vld [vmem:[%s251 + $0x3] sm:$0x1]
        %v298 = vlaneseq
        %v299 = vshrl.u32 %v298, 7
        %v300 = vsub.s32 0, %v299
        %v301 = vrot.slane %v290, %v300
        %v302 = vlaneseq
        %v303 = vshrl.u32 %v302, 7
        %v304 = vsub.s32 0, %v303
        %v305 = vrot.slane %v291, %v304
        %v306 = vlaneseq
        %v307 = vshrl.u32 %v306, 7
        %v308 = vsub.s32 0, %v307
        %v309 = vrot.slane %v292, %v308
        %v310 = vlaneseq
        %v311 = vshrl.u32 %v310, 7
        %v312 = vsub.s32 0, %v311
        %v313 = vrot.slane %v293, %v312
        %v318 = vadd.f32 %v286, %v301
        %v319 = vadd.f32 %v287, %v305
        %v320 = vadd.f32 %v288, %v309
        %v321 = vadd.f32 %v289, %v313
        %v322 = vld [vmem:[%s2] sm:$0x1]
        %v324 = vlaneseq
        %v325 = vshrl.u32 %v324, 7
        %v326 = vsub.s32 0, %v325
        %v327 = vrot.slane %v322, %v326
        %v329 = vadd.f32 %v318, %v327
        %v330 = vadd.f32 %v319, %v327
        %v331 = vadd.f32 %v320, %v327
        %v332 = vadd.f32 %v321, %v327
        %333 = vadd.xlane.f32.xlu0 %v329
        %v334 = vpop.xlane.xlu0 %333
        %335 = vadd.xlane.f32.xlu0 %v330
        %v336 = vpop.xlane.xlu0 %335
        %337 = vadd.xlane.f32.xlu0 %v331
        %v338 = vpop.xlane.xlu0 %337
        %339 = vadd.xlane.f32.xlu0 %v332
        %v340 = vpop.xlane.xlu0 %339
        %v341 = vrcp.pop 128.0
        %v342 = vmul.f32 %v334, %v341
        %v343 = vmul.f32 %v336, %v341
        %v344 = vmul.f32 %v338, %v341
        %v345 = vmul.f32 %v340, %v341
        %v346 = vsub.f32 %v329, %v342
        %v347 = vsub.f32 %v330, %v343
        %v348 = vsub.f32 %v331, %v344
        %v349 = vsub.f32 %v332, %v345
        %v350 = vmul.f32 %v346, %v346
        %v351 = vmul.f32 %v347, %v347
        %v352 = vmul.f32 %v348, %v348
        %v353 = vmul.f32 %v349, %v349
        %354 = vadd.xlane.f32.xlu0 %v350
        %v355 = vpop.xlane.xlu0 %354
        %356 = vadd.xlane.f32.xlu0 %v351
        %v357 = vpop.xlane.xlu0 %356
        %358 = vadd.xlane.f32.xlu0 %v352
        %v359 = vpop.xlane.xlu0 %358
        %360 = vadd.xlane.f32.xlu0 %v353
        %v361 = vpop.xlane.xlu0 %360
        %v362 = vmul.f32 %v355, %v341
        %v363 = vmul.f32 %v357, %v341
        %v364 = vmul.f32 %v359, %v341
        %v365 = vmul.f32 %v361, %v341
        %v366 = vadd.f32 %v362, 1e-12
        %v367 = vadd.f32 %v363, 1e-12
        %v368 = vadd.f32 %v364, 1e-12
        %v369 = vadd.f32 %v365, 1e-12
        %v370 = vrsqrt.pop %v366
        %v371 = vrsqrt.pop %v367
        %v372 = vrsqrt.pop %v368
        %v373 = vrsqrt.pop %v369
        %v374 = vmul.f32 %v346, %v370
        %v375 = vmul.f32 %v347, %v371
        %v376 = vmul.f32 %v348, %v372
        %v377 = vmul.f32 %v349, %v373
        %v378 = vld [vmem:[%s3] sm:$0x1]
        %v380 = vlaneseq
        %v381 = vshrl.u32 %v380, 7
        %v382 = vsub.s32 0, %v381
        %v383 = vrot.slane %v378, %v382
        %v385 = vmul.f32 %v374, %v383
        %v386 = vmul.f32 %v375, %v383
        %v387 = vmul.f32 %v376, %v383
        %v388 = vmul.f32 %v377, %v383
        %v389 = vld [vmem:[%s4] sm:$0x1]
        %v391 = vlaneseq
        %v392 = vshrl.u32 %v391, 7
        %v393 = vsub.s32 0, %v392
        %v394 = vrot.slane %v389, %v393
        %v396 = vadd.f32 %v385, %v394
        %v397 = vadd.f32 %v386, %v394
        %v398 = vadd.f32 %v387, %v394
        %v399 = vadd.f32 %v388, %v394
        %400 = vst [vmem:[%s282] sm:$0xff] %v396
        %401 = vst [vmem:[%s282 + $0x8] sm:$0xff] %v397
        %402 = vst [vmem:[%s282 + $0x10] sm:$0xff] %v398
        %403 = vst [vmem:[%s282 + $0x18] sm:$0xff] %v399
        %s404 = sand.u32 %s148, 1
        %s405 = scalar_lea.sflag [#allocation4], %s404
        %s406 = sand.u32 %s148, 1
        %s407 = smul.addr %s406, 32
        %s408 = scalar_lea.vmem [#allocation7], %s407
        // Predicated region
        $region49: #{positional_encodings.1} parent=39 // pred_check
          %p409 = pneg %p158
        $region50: #{positional_encodings.1} parent=39 // pred_check_branch
          %411 = sbr.rel (%p409) target = $region52
        $region51: #{positional_encodings.1} parent=39 // pred_region
          %s412 = smul.u32 4, %s25
          %s414 = ssub.s32 512, 512
          %415 = vsyncadd %s405, %s414
          %s416 = smul.addr %s412, 128
          %s417 = scalar_lea.hbm %s5, %s416
          %s418 = sshll.u32 %s408, 4
          %s419 = int_to_ptr.vmem [resolvable:$true] %s418
          %424 = dma.vmem_to_hbm [thread:$0]  %s419, 512, %s417, %s405, 128, 128, 8
        $region52: #{positional_encodings.1} parent=39 // pred_fallthru
          _
      $region40: #{positional_encodings.1} parent=5 // pred_fallthru
        _
      %p425 = scmp.le.s32.totalorder 2, %s20
      // Predicated region
      $region53: #{positional_encodings.1} parent=5 // pred_check
        %p426 = pneg %p425
      $region54: #{positional_encodings.1} parent=5 // pred_check_branch
        %428 = sbr.rel (%p426) target = $region56
      $region55: #{positional_encodings.1} parent=5 // pred_region
        %s429 = ssub.s32 %s20, 2
        // Predicated region
        $region57: #{positional_encodings.1} parent=55 // pred_check
          %p430 = pneg %p164
        $region58: #{positional_encodings.1} parent=55 // pred_check_branch
          %432 = sbr.rel (%p430) target = $region60
        $region59: #{positional_encodings.1} parent=55 // pred_region
          %s433 = sand.u32 %s149, 1
          %s434 = scalar_lea.sflag [#allocation4], %s433
          %s435 = sand.u32 %s149, 1
          %s436 = smul.addr %s435, 32
          %s437 = scalar_lea.vmem [#allocation7], %s436
          %438 = dma.done %s434, 512
        $region60: #{positional_encodings.1} parent=55 // pred_fallthru
          _
      $region56: #{positional_encodings.1} parent=5 // pred_fallthru
        _
    $region6: #{positional_encodings.1} parent=1 // loop_footer
      %s24 = sadd.s32 1, %s20
    $region7: #{positional_encodings.1} parent=1 // loop_footer_branch
      %19 = sbr.rel target = $region3
    $region8: #{positional_encodings.1} parent=1 // loop_exit
      _
    %439 = vsyncpa [#allocation3], 1
    %s440 = scalar_lea.sflag [#allocation3], 1
    %441 = vsyncpa %s440, 1
    %442 = vsyncpa [#allocation6], 1
    %s443 = scalar_lea.sflag [#allocation6], 1
    %444 = vsyncpa %s443, 1
    %445 = vsyncpa [#allocation4], 1
    %s446 = scalar_lea.sflag [#allocation4], 1
    %447 = vsyncpa %s446, 1

</llo_original>
